<compile_context>
chip_gen: v7x
topology: tpu7x:2x2x1
jax: 0.10.0
libtpu: 0.0.40
codegen_flags: <defaults>
</compile_context>

<pallas_src>
import functools

import jax
import jax.numpy as jnp
import numpy as np
from jax.experimental import pallas as pl
from jax.experimental.pallas import tpu as pltpu

BATCH_TILE = 8  # sublane height of one batch tile


def lstm_kernel(x_ref, w_ih_ref, w_hh_ref, w_fc_ref, b_fc_ref, out_ref,
                *, seq_len, hidden, batch_tile):
    """One 8-row batch tile: whole-sequence LSTM recurrence + final linear.

    x_ref:    (T*BT, D+1)  inputs for this tile, t-major on sublanes, with a
                           trailing ones-column (bias folding)
    w_ih_ref: (D+1, 4H)    [W_ih^T ; (b_ih + b_hh)]   (gate order i, f, g, o)
    w_hh_ref: (H, 4H)      W_hh^T
    w_fc_ref: (H, C)       fc weight, transposed
    b_fc_ref: (1, C)
    out_ref:  (BT, C)      fc(h_T) for this batch tile
    """
    T, H, BT = seq_len, hidden, batch_tile

    # ---- prologue: input projection for ALL timesteps in one MXU call, with
    # the combined LSTM bias folded in via the ones-column / bias-row. ----
    xw_all = jnp.dot(x_ref[...], w_ih_ref[...],
                     preferred_element_type=jnp.float32)        # (T*BT, 4H)

    w_hh = w_hh_ref[...]                                         # (H, 4H)

    h = jnp.zeros((BT, H), jnp.float32)
    c = jnp.zeros((BT, H), jnp.float32)

    # ---- serial recurrence, fully unrolled (T static). Per step: one tiny
    # MXU dot, one single-vreg sigmoid + tanh (EUP), a handful of VPU ops. ----
    # TODO(synk): holding W_hh in the MXU weight-staging registers via
    # pltpu.matmul_push_rhs / matmul_acc_lhs would remove T-1 redundant weight
    # pushes; kept on the well-trodden jnp.dot path for robustness.
    for t in range(T):
        xw_t = xw_all[t * BT:(t + 1) * BT, :]          # sublane-aligned slice
        gates = xw_t + jnp.dot(h, w_hh,
                               preferred_element_type=jnp.float32)  # (BT, 4H)
        sig = jax.nn.sigmoid(gates)    # whole gate vreg, one EUP pass
        tah = jnp.tanh(gates)          # whole gate vreg, one EUP pass
        i = sig[:, 0 * H:1 * H]
        f = sig[:, 1 * H:2 * H]
        g = tah[:, 2 * H:3 * H]
        o = sig[:, 3 * H:4 * H]
        c = f * c + i * g
        h = o * jnp.tanh(c)

    # ---- epilogue: fc(h_T), already batch-major -> no host-side transpose ----
    out_ref[...] = (jnp.dot(h, w_fc_ref[...],
                            preferred_element_type=jnp.float32)
                    + b_fc_ref[...])


def lstm_forward(x, w_ih, w_hh, b_ih, b_hh, w_fc, b_fc):
    """x: (B, T, D) float32 (batch-first). Returns (B, num_classes)."""
    x = jnp.asarray(x, jnp.float32)
    B, T, D = x.shape
    H = w_hh.shape[1]
    C = w_fc.shape[0]
    BT = BATCH_TILE
    n_tiles = (B + BT - 1) // BT
    Bp = n_tiles * BT

    # Batch-pad, append the ones column (bias folding), and lay each batch tile
    # out t-major on sublanes: (n_tiles, T*BT, D+1).
    x_p = jnp.pad(x, ((0, Bp - B), (0, 0), (0, 0)))                 # (Bp,T,D)
    ones = jnp.ones((Bp, T, 1), jnp.float32)
    x_a = jnp.concatenate([x_p, ones], axis=-1)                     # (Bp,T,D+1)
    x_a = (x_a.reshape(n_tiles, BT, T, D + 1)
              .transpose(0, 2, 1, 3)
              .reshape(n_tiles, T * BT, D + 1))

    b = jnp.asarray(b_ih, jnp.float32) + jnp.asarray(b_hh, jnp.float32)
    w_ih_aug = jnp.concatenate(
        [jnp.asarray(w_ih, jnp.float32).T, b[None, :]], axis=0)     # (D+1,4H)
    w_hh_t = jnp.asarray(w_hh, jnp.float32).T                       # (H, 4H)
    w_fc_t = jnp.asarray(w_fc, jnp.float32).T                       # (H, C)
    b_fc2 = jnp.asarray(b_fc, jnp.float32).reshape(1, C)            # (1, C)

    kernel = functools.partial(lstm_kernel, seq_len=T, hidden=H, batch_tile=BT)

    # Advisory cost estimate so XLA schedules this call sensibly.
    flops = int(2 * (T * Bp) * (D + 1) * 4 * H        # input projection
                + T * 2 * Bp * H * 4 * H              # recurrent matmuls
                + T * 8 * Bp * 4 * H                  # gate elementwise
                + 2 * Bp * H * C)                     # final fc
    transcendentals = int(T * (2 * Bp * 4 * H + Bp * H))
    bytes_accessed = int(4 * (x_a.size + w_ih_aug.size + w_hh_t.size
                              + w_fc_t.size + b_fc2.size + Bp * C))

    out = pl.pallas_call(
        kernel,
        out_shape=jax.ShapeDtypeStruct((Bp, C), jnp.float32),
        grid=(n_tiles,),
        in_specs=[
            pl.BlockSpec((None, T * BT, D + 1), lambda bt: (bt, 0, 0)),
            pl.BlockSpec((D + 1, 4 * H), lambda bt: (0, 0)),
            pl.BlockSpec((H, 4 * H), lambda bt: (0, 0)),
            pl.BlockSpec((H, C), lambda bt: (0, 0)),
            pl.BlockSpec((1, C), lambda bt: (0, 0)),
        ],
        out_specs=pl.BlockSpec((BT, C), lambda bt: (bt, 0)),
        compiler_params=pltpu.CompilerParams(
            dimension_semantics=("parallel",)),
        cost_estimate=pl.CostEstimate(flops=flops,
                                      transcendentals=transcendentals,
                                      bytes_accessed=bytes_accessed),
    )(x_a, w_ih_aug, w_hh_t, w_fc_t, b_fc2)

    # Drop batch padding (already batch-major, no transpose needed).
    return out[:B]


def lstm_forward_ref(x, w_ih, w_hh, b_ih, b_hh, w_fc, b_fc):
    """Pure-JAX reference matching torch.nn.LSTM(batch_first=True) + Linear."""
    B, T, D = x.shape
    H = w_hh.shape[1]
    h = jnp.zeros((B, H), jnp.float32)
    c = jnp.zeros((B, H), jnp.float32)
    for t in range(T):
        gates = x[:, t, :] @ w_ih.T + b_ih + h @ w_hh.T + b_hh
        i = jax.nn.sigmoid(gates[:, 0 * H:1 * H])
        f = jax.nn.sigmoid(gates[:, 1 * H:2 * H])
        g = jnp.tanh(gates[:, 2 * H:3 * H])
        o = jax.nn.sigmoid(gates[:, 3 * H:4 * H])
        c = f * c + i * g
        h = o * jnp.tanh(c)
    return h @ w_fc.T + b_fc


if __name__ == "__main__":
    input_size = 4
    hidden_size = 32
    num_classes = 8
    batch = 2
    seq = 8

    key = jax.random.PRNGKey(0)
    keys = jax.random.split(key, 7)
    # Deterministic parameter init (uniform, PyTorch-like scale 1/sqrt(H)).
    scale = 1.0 / np.sqrt(hidden_size)
    w_ih = jax.random.uniform(keys[0], (4 * hidden_size, input_size),
                              minval=-scale, maxval=scale, dtype=jnp.float32)
    w_hh = jax.random.uniform(keys[1], (4 * hidden_size, hidden_size),
                              minval=-scale, maxval=scale, dtype=jnp.float32)
    b_ih = jax.random.uniform(keys[2], (4 * hidden_size,),
                              minval=-scale, maxval=scale, dtype=jnp.float32)
    b_hh = jax.random.uniform(keys[3], (4 * hidden_size,),
                              minval=-scale, maxval=scale, dtype=jnp.float32)
    w_fc = jax.random.uniform(keys[4], (num_classes, hidden_size),
                              minval=-scale, maxval=scale, dtype=jnp.float32)
    b_fc = jax.random.uniform(keys[5], (num_classes,),
                              minval=-scale, maxval=scale, dtype=jnp.float32)

    x = jax.random.normal(keys[6], (batch, seq, input_size), dtype=jnp.float32)

    # GaussianNoise is a no-op in eval mode and is never called in forward().
    fwd = jax.jit(lstm_forward)   # fuse the tiny host-side prep / slice ops
    out = fwd(x, w_ih, w_hh, b_ih, b_hh, w_fc, b_fc)
    out = jax.block_until_ready(out)

    ref = lstm_forward_ref(x, w_ih, w_hh, b_ih, b_hh, w_fc, b_fc)
    np.testing.assert_allclose(np.asarray(out), np.asarray(ref),
                               rtol=1e-5, atol=1e-5)

    print("KERNEL_OK")
</pallas_src>

<mosaic_0001>
module attributes {stable_mosaic.version = 11 : i64} {
  func.func @lstm_kernel(%arg0: i32, %arg1: memref<1x64x5xf32, #tpu.memory_space<vmem>>, %arg2: memref<5x128xf32, #tpu.memory_space<vmem>>, %arg3: memref<32x128xf32, #tpu.memory_space<vmem>>, %arg4: memref<32x8xf32, #tpu.memory_space<vmem>>, %arg5: memref<1x8xf32, #tpu.memory_space<vmem>>, %arg6: memref<8x8xf32, #tpu.memory_space<vmem>>) attributes {dimension_semantics = [#tpu.dimension_semantics<parallel>], iteration_bounds = array<i64: 1>, scalar_prefetch = 0 : i64, scratch_operands = 0 : i64, tpu.core_type = #tpu.core_type<tc>, window_params = [{transform_indices = @transform_0, window_bounds = array<i64: 1, 64, 5>}, {pipeline_mode = #tpu.pipeline_mode<synchronous>, transform_indices = @transform_1, window_bounds = array<i64: 5, 128>}, {pipeline_mode = #tpu.pipeline_mode<synchronous>, transform_indices = @transform_2, window_bounds = array<i64: 32, 128>}, {pipeline_mode = #tpu.pipeline_mode<synchronous>, transform_indices = @transform_3, window_bounds = array<i64: 32, 8>}, {pipeline_mode = #tpu.pipeline_mode<synchronous>, transform_indices = @transform_4, window_bounds = array<i64: 1, 8>}, {transform_indices = @transform_5, window_bounds = array<i64: 8, 8>}]} {
    %c0 = arith.constant 0 : index
    %c0_0 = arith.constant 0 : index
    %c0_1 = arith.constant 0 : index
    %0 = vector.load %arg1[%c0, %c0_0, %c0_1] : memref<1x64x5xf32, #tpu.memory_space<vmem>>, vector<1x64x5xf32>
    %1 = vector.shape_cast %0 : vector<1x64x5xf32> to vector<64x5xf32>
    %c0_2 = arith.constant 0 : index
    %c0_3 = arith.constant 0 : index
    %2 = vector.load %arg2[%c0_2, %c0_3] : memref<5x128xf32, #tpu.memory_space<vmem>>, vector<5x128xf32>
    %cst = arith.constant dense<0.000000e+00> : vector<64x128xf32>
    %3 = tpu.matmul %1, %2, %cst {dimension_numbers = #tpu.dot_dimension_numbers<[1], [0], [0], [1], [0, 0, 1, 1], [], []>} : vector<64x5xf32>, vector<5x128xf32>, vector<64x128xf32> -> vector<64x128xf32>
    %c0_4 = arith.constant 0 : index
    %c0_5 = arith.constant 0 : index
    %4 = vector.load %arg3[%c0_4, %c0_5] : memref<32x128xf32, #tpu.memory_space<vmem>>, vector<32x128xf32>
    %cst_6 = arith.constant 0.000000e+00 : f32
    %5 = vector.broadcast %cst_6 : f32 to vector<8x32xf32>
    %cst_7 = arith.constant 0.000000e+00 : f32
    %6 = vector.broadcast %cst_7 : f32 to vector<8x32xf32>
    %7 = vector.extract_strided_slice %3 {offsets = [0, 0], sizes = [8, 128], strides = [1, 1]} : vector<64x128xf32> to vector<8x128xf32>
    %cst_8 = arith.constant dense<0.000000e+00> : vector<8x128xf32>
    %8 = tpu.matmul %5, %4, %cst_8 {dimension_numbers = #tpu.dot_dimension_numbers<[1], [0], [0], [1], [0, 0, 1, 1], [], []>} : vector<8x32xf32>, vector<32x128xf32>, vector<8x128xf32> -> vector<8x128xf32>
    %9 = arith.addf %7, %8 : vector<8x128xf32>
    %10 = arith.negf %9 : vector<8x128xf32>
    %11 = math.exp %10 : vector<8x128xf32>
    %cst_9 = arith.constant 1.000000e+00 : f32
    %12 = vector.broadcast %cst_9 : f32 to vector<8x128xf32>
    %13 = arith.addf %12, %11 : vector<8x128xf32>
    %14 = arith.divf %12, %13 : vector<8x128xf32>
    %15 = math.tanh %9 : vector<8x128xf32>
    %16 = vector.extract_strided_slice %14 {offsets = [0, 0], sizes = [8, 32], strides = [1, 1]} : vector<8x128xf32> to vector<8x32xf32>
    %17 = vector.extract_strided_slice %14 {offsets = [0, 32], sizes = [8, 32], strides = [1, 1]} : vector<8x128xf32> to vector<8x32xf32>
    %18 = vector.extract_strided_slice %15 {offsets = [0, 64], sizes = [8, 32], strides = [1, 1]} : vector<8x128xf32> to vector<8x32xf32>
    %19 = vector.extract_strided_slice %14 {offsets = [0, 96], sizes = [8, 32], strides = [1, 1]} : vector<8x128xf32> to vector<8x32xf32>
    %20 = arith.mulf %17, %6 : vector<8x32xf32>
    %21 = arith.mulf %16, %18 : vector<8x32xf32>
    %22 = arith.addf %20, %21 : vector<8x32xf32>
    %23 = math.tanh %22 : vector<8x32xf32>
    %24 = arith.mulf %19, %23 : vector<8x32xf32>
    %25 = vector.extract_strided_slice %3 {offsets = [8, 0], sizes = [8, 128], strides = [1, 1]} : vector<64x128xf32> to vector<8x128xf32>
    %cst_10 = arith.constant dense<0.000000e+00> : vector<8x128xf32>
    %26 = tpu.matmul %24, %4, %cst_10 {dimension_numbers = #tpu.dot_dimension_numbers<[1], [0], [0], [1], [0, 0, 1, 1], [], []>} : vector<8x32xf32>, vector<32x128xf32>, vector<8x128xf32> -> vector<8x128xf32>
    %27 = arith.addf %25, %26 : vector<8x128xf32>
    %28 = arith.negf %27 : vector<8x128xf32>
    %29 = math.exp %28 : vector<8x128xf32>
    %cst_11 = arith.constant 1.000000e+00 : f32
    %30 = vector.broadcast %cst_11 : f32 to vector<8x128xf32>
    %31 = arith.addf %30, %29 : vector<8x128xf32>
    %32 = arith.divf %30, %31 : vector<8x128xf32>
    %33 = math.tanh %27 : vector<8x128xf32>
    %34 = vector.extract_strided_slice %32 {offsets = [0, 0], sizes = [8, 32], strides = [1, 1]} : vector<8x128xf32> to vector<8x32xf32>
    %35 = vector.extract_strided_slice %32 {offsets = [0, 32], sizes = [8, 32], strides = [1, 1]} : vector<8x128xf32> to vector<8x32xf32>
    %36 = vector.extract_strided_slice %33 {offsets = [0, 64], sizes = [8, 32], strides = [1, 1]} : vector<8x128xf32> to vector<8x32xf32>
    %37 = vector.extract_strided_slice %32 {offsets = [0, 96], sizes = [8, 32], strides = [1, 1]} : vector<8x128xf32> to vector<8x32xf32>
    %38 = arith.mulf %35, %22 : vector<8x32xf32>
    %39 = arith.mulf %34, %36 : vector<8x32xf32>
    %40 = arith.addf %38, %39 : vector<8x32xf32>
    %41 = math.tanh %40 : vector<8x32xf32>
    %42 = arith.mulf %37, %41 : vector<8x32xf32>
    %43 = vector.extract_strided_slice %3 {offsets = [16, 0], sizes = [8, 128], strides = [1, 1]} : vector<64x128xf32> to vector<8x128xf32>
    %cst_12 = arith.constant dense<0.000000e+00> : vector<8x128xf32>
    %44 = tpu.matmul %42, %4, %cst_12 {dimension_numbers = #tpu.dot_dimension_numbers<[1], [0], [0], [1], [0, 0, 1, 1], [], []>} : vector<8x32xf32>, vector<32x128xf32>, vector<8x128xf32> -> vector<8x128xf32>
    %45 = arith.addf %43, %44 : vector<8x128xf32>
    %46 = arith.negf %45 : vector<8x128xf32>
    %47 = math.exp %46 : vector<8x128xf32>
    %cst_13 = arith.constant 1.000000e+00 : f32
    %48 = vector.broadcast %cst_13 : f32 to vector<8x128xf32>
    %49 = arith.addf %48, %47 : vector<8x128xf32>
    %50 = arith.divf %48, %49 : vector<8x128xf32>
    %51 = math.tanh %45 : vector<8x128xf32>
    %52 = vector.extract_strided_slice %50 {offsets = [0, 0], sizes = [8, 32], strides = [1, 1]} : vector<8x128xf32> to vector<8x32xf32>
    %53 = vector.extract_strided_slice %50 {offsets = [0, 32], sizes = [8, 32], strides = [1, 1]} : vector<8x128xf32> to vector<8x32xf32>
    %54 = vector.extract_strided_slice %51 {offsets = [0, 64], sizes = [8, 32], strides = [1, 1]} : vector<8x128xf32> to vector<8x32xf32>
    %55 = vector.extract_strided_slice %50 {offsets = [0, 96], sizes = [8, 32], strides = [1, 1]} : vector<8x128xf32> to vector<8x32xf32>
    %56 = arith.mulf %53, %40 : vector<8x32xf32>
    %57 = arith.mulf %52, %54 : vector<8x32xf32>
    %58 = arith.addf %56, %57 : vector<8x32xf32>
    %59 = math.tanh %58 : vector<8x32xf32>
    %60 = arith.mulf %55, %59 : vector<8x32xf32>
    %61 = vector.extract_strided_slice %3 {offsets = [24, 0], sizes = [8, 128], strides = [1, 1]} : vector<64x128xf32> to vector<8x128xf32>
    %cst_14 = arith.constant dense<0.000000e+00> : vector<8x128xf32>
    %62 = tpu.matmul %60, %4, %cst_14 {dimension_numbers = #tpu.dot_dimension_numbers<[1], [0], [0], [1], [0, 0, 1, 1], [], []>} : vector<8x32xf32>, vector<32x128xf32>, vector<8x128xf32> -> vector<8x128xf32>
    %63 = arith.addf %61, %62 : vector<8x128xf32>
    %64 = arith.negf %63 : vector<8x128xf32>
    %65 = math.exp %64 : vector<8x128xf32>
    %cst_15 = arith.constant 1.000000e+00 : f32
    %66 = vector.broadcast %cst_15 : f32 to vector<8x128xf32>
    %67 = arith.addf %66, %65 : vector<8x128xf32>
    %68 = arith.divf %66, %67 : vector<8x128xf32>
    %69 = math.tanh %63 : vector<8x128xf32>
    %70 = vector.extract_strided_slice %68 {offsets = [0, 0], sizes = [8, 32], strides = [1, 1]} : vector<8x128xf32> to vector<8x32xf32>
    %71 = vector.extract_strided_slice %68 {offsets = [0, 32], sizes = [8, 32], strides = [1, 1]} : vector<8x128xf32> to vector<8x32xf32>
    %72 = vector.extract_strided_slice %69 {offsets = [0, 64], sizes = [8, 32], strides = [1, 1]} : vector<8x128xf32> to vector<8x32xf32>
    %73 = vector.extract_strided_slice %68 {offsets = [0, 96], sizes = [8, 32], strides = [1, 1]} : vector<8x128xf32> to vector<8x32xf32>
    %74 = arith.mulf %71, %58 : vector<8x32xf32>
    %75 = arith.mulf %70, %72 : vector<8x32xf32>
    %76 = arith.addf %74, %75 : vector<8x32xf32>
    %77 = math.tanh %76 : vector<8x32xf32>
    %78 = arith.mulf %73, %77 : vector<8x32xf32>
    %79 = vector.extract_strided_slice %3 {offsets = [32, 0], sizes = [8, 128], strides = [1, 1]} : vector<64x128xf32> to vector<8x128xf32>
    %cst_16 = arith.constant dense<0.000000e+00> : vector<8x128xf32>
    %80 = tpu.matmul %78, %4, %cst_16 {dimension_numbers = #tpu.dot_dimension_numbers<[1], [0], [0], [1], [0, 0, 1, 1], [], []>} : vector<8x32xf32>, vector<32x128xf32>, vector<8x128xf32> -> vector<8x128xf32>
    %81 = arith.addf %79, %80 : vector<8x128xf32>
    %82 = arith.negf %81 : vector<8x128xf32>
    %83 = math.exp %82 : vector<8x128xf32>
    %cst_17 = arith.constant 1.000000e+00 : f32
    %84 = vector.broadcast %cst_17 : f32 to vector<8x128xf32>
    %85 = arith.addf %84, %83 : vector<8x128xf32>
    %86 = arith.divf %84, %85 : vector<8x128xf32>
    %87 = math.tanh %81 : vector<8x128xf32>
    %88 = vector.extract_strided_slice %86 {offsets = [0, 0], sizes = [8, 32], strides = [1, 1]} : vector<8x128xf32> to vector<8x32xf32>
    %89 = vector.extract_strided_slice %86 {offsets = [0, 32], sizes = [8, 32], strides = [1, 1]} : vector<8x128xf32> to vector<8x32xf32>
    %90 = vector.extract_strided_slice %87 {offsets = [0, 64], sizes = [8, 32], strides = [1, 1]} : vector<8x128xf32> to vector<8x32xf32>
    %91 = vector.extract_strided_slice %86 {offsets = [0, 96], sizes = [8, 32], strides = [1, 1]} : vector<8x128xf32> to vector<8x32xf32>
    %92 = arith.mulf %89, %76 : vector<8x32xf32>
    %93 = arith.mulf %88, %90 : vector<8x32xf32>
    %94 = arith.addf %92, %93 : vector<8x32xf32>
    %95 = math.tanh %94 : vector<8x32xf32>
    %96 = arith.mulf %91, %95 : vector<8x32xf32>
    %97 = vector.extract_strided_slice %3 {offsets = [40, 0], sizes = [8, 128], strides = [1, 1]} : vector<64x128xf32> to vector<8x128xf32>
    %cst_18 = arith.constant dense<0.000000e+00> : vector<8x128xf32>
    %98 = tpu.matmul %96, %4, %cst_18 {dimension_numbers = #tpu.dot_dimension_numbers<[1], [0], [0], [1], [0, 0, 1, 1], [], []>} : vector<8x32xf32>, vector<32x128xf32>, vector<8x128xf32> -> vector<8x128xf32>
    %99 = arith.addf %97, %98 : vector<8x128xf32>
    %100 = arith.negf %99 : vector<8x128xf32>
    %101 = math.exp %100 : vector<8x128xf32>
    %cst_19 = arith.constant 1.000000e+00 : f32
    %102 = vector.broadcast %cst_19 : f32 to vector<8x128xf32>
    %103 = arith.addf %102, %101 : vector<8x128xf32>
    %104 = arith.divf %102, %103 : vector<8x128xf32>
    %105 = math.tanh %99 : vector<8x128xf32>
    %106 = vector.extract_strided_slice %104 {offsets = [0, 0], sizes = [8, 32], strides = [1, 1]} : vector<8x128xf32> to vector<8x32xf32>
    %107 = vector.extract_strided_slice %104 {offsets = [0, 32], sizes = [8, 32], strides = [1, 1]} : vector<8x128xf32> to vector<8x32xf32>
    %108 = vector.extract_strided_slice %105 {offsets = [0, 64], sizes = [8, 32], strides = [1, 1]} : vector<8x128xf32> to vector<8x32xf32>
    %109 = vector.extract_strided_slice %104 {offsets = [0, 96], sizes = [8, 32], strides = [1, 1]} : vector<8x128xf32> to vector<8x32xf32>
    %110 = arith.mulf %107, %94 : vector<8x32xf32>
    %111 = arith.mulf %106, %108 : vector<8x32xf32>
    %112 = arith.addf %110, %111 : vector<8x32xf32>
    %113 = math.tanh %112 : vector<8x32xf32>
    %114 = arith.mulf %109, %113 : vector<8x32xf32>
    %115 = vector.extract_strided_slice %3 {offsets = [48, 0], sizes = [8, 128], strides = [1, 1]} : vector<64x128xf32> to vector<8x128xf32>
    %cst_20 = arith.constant dense<0.000000e+00> : vector<8x128xf32>
    %116 = tpu.matmul %114, %4, %cst_20 {dimension_numbers = #tpu.dot_dimension_numbers<[1], [0], [0], [1], [0, 0, 1, 1], [], []>} : vector<8x32xf32>, vector<32x128xf32>, vector<8x128xf32> -> vector<8x128xf32>
    %117 = arith.addf %115, %116 : vector<8x128xf32>
    %118 = arith.negf %117 : vector<8x128xf32>
    %119 = math.exp %118 : vector<8x128xf32>
    %cst_21 = arith.constant 1.000000e+00 : f32
    %120 = vector.broadcast %cst_21 : f32 to vector<8x128xf32>
    %121 = arith.addf %120, %119 : vector<8x128xf32>
    %122 = arith.divf %120, %121 : vector<8x128xf32>
    %123 = math.tanh %117 : vector<8x128xf32>
    %124 = vector.extract_strided_slice %122 {offsets = [0, 0], sizes = [8, 32], strides = [1, 1]} : vector<8x128xf32> to vector<8x32xf32>
    %125 = vector.extract_strided_slice %122 {offsets = [0, 32], sizes = [8, 32], strides = [1, 1]} : vector<8x128xf32> to vector<8x32xf32>
    %126 = vector.extract_strided_slice %123 {offsets = [0, 64], sizes = [8, 32], strides = [1, 1]} : vector<8x128xf32> to vector<8x32xf32>
    %127 = vector.extract_strided_slice %122 {offsets = [0, 96], sizes = [8, 32], strides = [1, 1]} : vector<8x128xf32> to vector<8x32xf32>
    %128 = arith.mulf %125, %112 : vector<8x32xf32>
    %129 = arith.mulf %124, %126 : vector<8x32xf32>
    %130 = arith.addf %128, %129 : vector<8x32xf32>
    %131 = math.tanh %130 : vector<8x32xf32>
    %132 = arith.mulf %127, %131 : vector<8x32xf32>
    %133 = vector.extract_strided_slice %3 {offsets = [56, 0], sizes = [8, 128], strides = [1, 1]} : vector<64x128xf32> to vector<8x128xf32>
    %cst_22 = arith.constant dense<0.000000e+00> : vector<8x128xf32>
    %134 = tpu.matmul %132, %4, %cst_22 {dimension_numbers = #tpu.dot_dimension_numbers<[1], [0], [0], [1], [0, 0, 1, 1], [], []>} : vector<8x32xf32>, vector<32x128xf32>, vector<8x128xf32> -> vector<8x128xf32>
    %135 = arith.addf %133, %134 : vector<8x128xf32>
    %136 = arith.negf %135 : vector<8x128xf32>
    %137 = math.exp %136 : vector<8x128xf32>
    %cst_23 = arith.constant 1.000000e+00 : f32
    %138 = vector.broadcast %cst_23 : f32 to vector<8x128xf32>
    %139 = arith.addf %138, %137 : vector<8x128xf32>
    %140 = arith.divf %138, %139 : vector<8x128xf32>
    %141 = math.tanh %135 : vector<8x128xf32>
    %142 = vector.extract_strided_slice %140 {offsets = [0, 0], sizes = [8, 32], strides = [1, 1]} : vector<8x128xf32> to vector<8x32xf32>
    %143 = vector.extract_strided_slice %140 {offsets = [0, 32], sizes = [8, 32], strides = [1, 1]} : vector<8x128xf32> to vector<8x32xf32>
    %144 = vector.extract_strided_slice %141 {offsets = [0, 64], sizes = [8, 32], strides = [1, 1]} : vector<8x128xf32> to vector<8x32xf32>
    %145 = vector.extract_strided_slice %140 {offsets = [0, 96], sizes = [8, 32], strides = [1, 1]} : vector<8x128xf32> to vector<8x32xf32>
    %146 = arith.mulf %143, %130 : vector<8x32xf32>
    %147 = arith.mulf %142, %144 : vector<8x32xf32>
    %148 = arith.addf %146, %147 : vector<8x32xf32>
    %149 = math.tanh %148 : vector<8x32xf32>
    %150 = arith.mulf %145, %149 : vector<8x32xf32>
    %c0_24 = arith.constant 0 : index
    %c0_25 = arith.constant 0 : index
    %151 = vector.load %arg4[%c0_24, %c0_25] : memref<32x8xf32, #tpu.memory_space<vmem>>, vector<32x8xf32>
    %cst_26 = arith.constant dense<0.000000e+00> : vector<8x8xf32>
    %152 = tpu.matmul %150, %151, %cst_26 {dimension_numbers = #tpu.dot_dimension_numbers<[1], [0], [0], [1], [0, 0, 1, 1], [], []>} : vector<8x32xf32>, vector<32x8xf32>, vector<8x8xf32> -> vector<8x8xf32>
    %c0_27 = arith.constant 0 : index
    %c0_28 = arith.constant 0 : index
    %153 = vector.load %arg5[%c0_27, %c0_28] : memref<1x8xf32, #tpu.memory_space<vmem>>, vector<1x8xf32>
    %154 = vector.broadcast %153 : vector<1x8xf32> to vector<8x8xf32>
    %155 = arith.addf %152, %154 : vector<8x8xf32>
    %c0_29 = arith.constant 0 : index
    %c0_30 = arith.constant 0 : index
    %156 = vector.load %arg6[%c0_29, %c0_30] : memref<8x8xf32, #tpu.memory_space<vmem>>, vector<8x8xf32>
    tpu.vector_store %arg6[%c0_29, %c0_30], %155 {strides = array<i32>} : memref<8x8xf32, #tpu.memory_space<vmem>>, vector<8x8xf32>,
    return
  }
  func.func @transform_0(%arg0: i32) -> (i32, i32, i32) {
    %c0_i32 = arith.constant 0 : i32
    %c0_i32_0 = arith.constant 0 : i32
    %c0_i32_1 = arith.constant 0 : i32
    return %arg0, %c0_i32, %c0_i32_0 : i32, i32, i32
  }
  func.func @transform_1(%arg0: i32) -> (i32, i32) {
    %c0_i32 = arith.constant 0 : i32
    %c0_i32_0 = arith.constant 0 : i32
    %c0_i32_1 = arith.constant 0 : i32
    return %c0_i32, %c0_i32_0 : i32, i32
  }
  func.func @transform_2(%arg0: i32) -> (i32, i32) {
    %c0_i32 = arith.constant 0 : i32
    %c0_i32_0 = arith.constant 0 : i32
    %c0_i32_1 = arith.constant 0 : i32
    return %c0_i32, %c0_i32_0 : i32, i32
  }
  func.func @transform_3(%arg0: i32) -> (i32, i32) {
    %c0_i32 = arith.constant 0 : i32
    %c0_i32_0 = arith.constant 0 : i32
    %c0_i32_1 = arith.constant 0 : i32
    return %c0_i32, %c0_i32_0 : i32, i32
  }
  func.func @transform_4(%arg0: i32) -> (i32, i32) {
    %c0_i32 = arith.constant 0 : i32
    %c0_i32_0 = arith.constant 0 : i32
    %c0_i32_1 = arith.constant 0 : i32
    return %c0_i32, %c0_i32_0 : i32, i32
  }
  func.func @transform_5(%arg0: i32) -> (i32, i32) {
    %c0_i32 = arith.constant 0 : i32
    %c0_i32_0 = arith.constant 0 : i32
    return %arg0, %c0_i32 : i32, i32
  }
}

</mosaic_0001>

<llo_original>
// kernel: lstm_forward.1
$region0: #{lstm_forward.1}
  #allocation0 [shape = 'u32[]', space=smem, size = 0x4, offset = 0x4, fixed_abs, tag = 'smem constant byte address 0x4 - core index']
  #allocation1 [shape = 'u32[144,128]{1,0:T(1,128)}', space=vmem, size = 0x12000, scoped, tag = 'internal scratch']
  %s0 = inlined_call_operand.vmem [shape: f32[1,64,5], index: 0, kind: input, shape index: {}]
  %s1 = inlined_call_operand.vmem [shape: f32[5,128], index: 1, kind: input, shape index: {}]
  %s2 = inlined_call_operand.vmem [shape: f32[32,128], index: 2, kind: input, shape index: {}]
  %s3 = inlined_call_operand.vmem [shape: f32[32,8], index: 3, kind: input, shape index: {}]
  %s4 = inlined_call_operand.vmem [shape: f32[1,8], index: 4, kind: input, shape index: {}]
  %s5 = inlined_call_operand.vmem [shape: f32[8,8], index: 5, kind: output, shape index: {}]
  %s6 = sld [smem:[#allocation0]]
  $region30: #{lstm_forward.1} parent=0
    _
  %s8 = ssub.s32 1, %s6
  %s9 = scalar_select 0, %s8, %s6
  // Predicated region
  $region2: #{lstm_forward.1} parent=0 // pred_check
    _
  $region3: #{lstm_forward.1} parent=0 // pred_check_branch
    %11 = sbr.rel (0) target = $region5
  $region4: #{lstm_forward.1} parent=0 // pred_region
    _
  $region5: #{lstm_forward.1} parent=0 // pred_fallthru
    _
  // Predicated region
  $region6: #{lstm_forward.1} parent=0 // pred_check
    _
  $region7: #{lstm_forward.1} parent=0 // pred_check_branch
    %13 = sbr.rel (0) target = $region9
  $region8: #{lstm_forward.1} parent=0 // pred_region
    _
  $region9: #{lstm_forward.1} parent=0 // pred_fallthru
    _
  // Predicated region
  $region10: #{lstm_forward.1} parent=0 // pred_check
    _
  $region11: #{lstm_forward.1} parent=0 // pred_check_branch
    %15 = sbr.rel (0) target = $region13
  $region12: #{lstm_forward.1} parent=0 // pred_region
    _
  $region13: #{lstm_forward.1} parent=0 // pred_fallthru
    _
  // Predicated region
  $region14: #{lstm_forward.1} parent=0 // pred_check
    _
  $region15: #{lstm_forward.1} parent=0 // pred_check_branch
    %17 = sbr.rel (0) target = $region17
  $region16: #{lstm_forward.1} parent=0 // pred_region
    _
  $region17: #{lstm_forward.1} parent=0 // pred_fallthru
    _
  // Predicated region
  $region18: #{lstm_forward.1} parent=0 // pred_check
    _
  $region19: #{lstm_forward.1} parent=0 // pred_check_branch
    %19 = sbr.rel (0) target = $region21
  $region20: #{lstm_forward.1} parent=0 // pred_region
    _
  $region21: #{lstm_forward.1} parent=0 // pred_fallthru
    _
  %v20 = vld [vmem:[%s0] sm:$0xff]
  %v21 = vld [vmem:[%s0 + $0x8] sm:$0xff]
  %v22 = vld [vmem:[%s0 + $0x10] sm:$0xff]
  %v23 = vld [vmem:[%s0 + $0x18] sm:$0xff]
  %v24 = vld [vmem:[%s0 + $0x20] sm:$0xff]
  %v25 = vld [vmem:[%s0 + $0x28] sm:$0xff]
  %v26 = vld [vmem:[%s0 + $0x30] sm:$0xff]
  %v27 = vld [vmem:[%s0 + $0x38] sm:$0xff]
  %v28 = vld [vmem:[%s1] sm:$0x1f]
  %vm29 = vcmask 39936
  %v31 = vsel %vm29, %v20, 0
  %v34 = vsel %vm29, %v21, 0
  %v37 = vsel %vm29, %v22, 0
  %v40 = vsel %vm29, %v23, 0
  %v43 = vsel %vm29, %v24, 0
  %v46 = vsel %vm29, %v25, 0
  %v49 = vsel %vm29, %v26, 0
  %v52 = vsel %vm29, %v27, 0
  %vm54 = vcmask 1044480
  %v56 = vsel %vm54, %v28, 0
  %58 = vmatprep.subr.mxu0 0.0
  %59 = vmatpush1.msra.mxu0 %v56
  %60 = vmatprep.subr.mxu0 0.0
  %61 = vmatpush1.msra.mxu0 0.0
  %62 = vmatprep.subr.mxu0 0.0
  %63 = vmatpush1.msra.mxu0 0.0
  %64 = vmatprep.subr.mxu0 0.0
  %65 = vmatpush1.msra.mxu0 0.0
  %66 = vmatprep.subr.mxu0 0.0
  %67 = vmatpush1.msra.mxu0 0.0
  %68 = vmatprep.subr.mxu0 0.0
  %69 = vmatpush1.msra.mxu0 0.0
  %70 = vmatprep.subr.mxu0 0.0
  %71 = vmatpush1.msra.mxu0 0.0
  %72 = vmatprep.subr.mxu0 0.0
  %73 = vmatpush1.msra.mxu0 0.0
  %74 = vmatprep.subr.mxu0 0.0
  %75 = vmatpush1.msra.mxu0 0.0
  %76 = vmatprep.subr.mxu0 0.0
  %77 = vmatpush1.msra.mxu0 0.0
  %78 = vmatprep.subr.mxu0 0.0
  %79 = vmatpush1.msra.mxu0 0.0
  %80 = vmatprep.subr.mxu0 0.0
  %81 = vmatpush1.msra.mxu0 0.0
  %82 = vmatprep.subr.mxu0 0.0
  %83 = vmatpush1.msra.mxu0 0.0
  %84 = vmatprep.subr.mxu0 0.0
  %85 = vmatpush1.msra.mxu0 0.0
  %86 = vmatprep.subr.mxu0 0.0
  %87 = vmatpush1.msra.mxu0 0.0
  %88 = vmatprep.subr.mxu0 0.0
  %89 = vmatpush1.msra.mxu0 0.0
  %90 = vmatprep.subr.mxu0 0.0
  %91 = vmatpush1.msra.mxu0 0.0
  %92 = vmatprep.subr.mxu0 0.0
  %93 = vmatpush1.msra.mxu0 0.0
  %94 = vmatprep.subr.mxu0 0.0
  %95 = vmatpush1.msra.mxu0 0.0
  %96 = vmatprep.subr.mxu0 0.0
  %97 = vmatpush1.msra.mxu0 0.0
  %98 = vmatprep.subr.mxu0 0.0
  %99 = vmatpush1.msra.mxu0 0.0
  %100 = vmatprep.subr.mxu0 0.0
  %101 = vmatpush1.msra.mxu0 0.0
  %102 = vmatprep.subr.mxu0 0.0
  %103 = vmatpush1.msra.mxu0 0.0
  %104 = vmatprep.subr.mxu0 0.0
  %105 = vmatpush1.msra.mxu0 0.0
  %106 = vmatprep.subr.mxu0 0.0
  %107 = vmatpush1.msra.mxu0 0.0
  %108 = vmatprep.subr.mxu0 0.0
  %109 = vmatpush1.msra.mxu0 0.0
  %110 = vmatprep.subr.mxu0 0.0
  %111 = vmatpush1.msra.mxu0 0.0
  %112 = vmatprep.subr.mxu0 0.0
  %113 = vmatpush1.msra.mxu0 0.0
  %114 = vmatprep.subr.mxu0 0.0
  %115 = vmatpush1.msra.mxu0 0.0
  %116 = vmatprep.subr.mxu0 0.0
  %117 = vmatpush1.msra.mxu0 0.0
  %118 = vmatprep.subr.mxu0 0.0
  %119 = vmatpush1.msra.mxu0 0.0
  %120 = vmatprep.subr.mxu0 0.0
  %121 = vmatpush1.msra.mxu0 0.0
  %122 = vmatprep.mubr.f32.mxu0 0.0
  %123 = vmatmul.mubr.f32.gmra.mrb[0].mxu0 %v31
  %v124 = vpop.f32.mrb[0].mxu0
  %v125 = vadd.f32 0.0, %v124
  %v126 = vpop.f32.mrb[0].mxu0
  %127 = vmatprep.mubr.f32.mxu0 0.0
  %128 = vmatmul.mubr.f32.gmra.mrb[0].mxu0 %v34
  %v129 = vpop.f32.mrb[0].mxu0
  %v130 = vadd.f32 0.0, %v129
  %v131 = vpop.f32.mrb[0].mxu0
  %132 = vmatprep.mubr.f32.mxu0 0.0
  %133 = vmatmul.mubr.f32.gmra.mrb[0].mxu0 %v37
  %v134 = vpop.f32.mrb[0].mxu0
  %v135 = vadd.f32 0.0, %v134
  %v136 = vpop.f32.mrb[0].mxu0
  %137 = vmatprep.mubr.f32.mxu0 0.0
  %138 = vmatmul.mubr.f32.gmra.mrb[0].mxu0 %v40
  %v139 = vpop.f32.mrb[0].mxu0
  %v140 = vadd.f32 0.0, %v139
  %v141 = vpop.f32.mrb[0].mxu0
  %142 = vmatprep.mubr.f32.mxu0 0.0
  %143 = vmatmul.mubr.f32.gmra.mrb[0].mxu0 %v43
  %v144 = vpop.f32.mrb[0].mxu0
  %v145 = vadd.f32 0.0, %v144
  %v146 = vpop.f32.mrb[0].mxu0
  %147 = vmatprep.mubr.f32.mxu0 0.0
  %148 = vmatmul.mubr.f32.gmra.mrb[0].mxu0 %v46
  %v149 = vpop.f32.mrb[0].mxu0
  %v150 = vadd.f32 0.0, %v149
  %v151 = vpop.f32.mrb[0].mxu0
  %152 = vmatprep.mubr.f32.mxu0 0.0
  %153 = vmatmul.mubr.f32.gmra.mrb[0].mxu0 %v49
  %v154 = vpop.f32.mrb[0].mxu0
  %v155 = vadd.f32 0.0, %v154
  %v156 = vpop.f32.mrb[0].mxu0
  %157 = vmatprep.mubr.f32.mxu0 0.0
  %158 = vmatmul.mubr.f32.gmra.mrb[0].mxu0 %v52
  %v159 = vpop.f32.mrb[0].mxu0
  %v160 = vadd.f32 0.0, %v159
  %v161 = vpop.f32.mrb[0].mxu0
  %162 = vdwg.mxu0
  %v163 = vld [vmem:[%s2] sm:$0xff]
  %v164 = vld [vmem:[%s2 + $0x8] sm:$0xff]
  %v165 = vld [vmem:[%s2 + $0x10] sm:$0xff]
  %v166 = vld [vmem:[%s2 + $0x18] sm:$0xff]
  %vm167 = vcmask 261120
  %v169 = vsel %vm167, 0.0, 0
  %171 = vmatprep.subr.mxu0 0.0
  %172 = vmatpush1.msra.mxu0 %v163
  %173 = vmatprep.subr.mxu0 0.0
  %174 = vmatpush1.msra.mxu0 %v164
  %175 = vmatprep.subr.mxu0 0.0
  %176 = vmatpush1.msra.mxu0 %v165
  %177 = vmatprep.subr.mxu0 0.0
  %178 = vmatpush1.msra.mxu0 %v166
  %179 = vmatprep.subr.mxu0 0.0
  %180 = vmatpush1.msra.mxu0 0.0
  %181 = vmatprep.subr.mxu0 0.0
  %182 = vmatpush1.msra.mxu0 0.0
  %183 = vmatprep.subr.mxu0 0.0
  %184 = vmatpush1.msra.mxu0 0.0
  %185 = vmatprep.subr.mxu0 0.0
  %186 = vmatpush1.msra.mxu0 0.0
  %187 = vmatprep.subr.mxu0 0.0
  %188 = vmatpush1.msra.mxu0 0.0
  %189 = vmatprep.subr.mxu0 0.0
  %190 = vmatpush1.msra.mxu0 0.0
  %191 = vmatprep.subr.mxu0 0.0
  %192 = vmatpush1.msra.mxu0 0.0
  %193 = vmatprep.subr.mxu0 0.0
  %194 = vmatpush1.msra.mxu0 0.0
  %195 = vmatprep.subr.mxu0 0.0
  %196 = vmatpush1.msra.mxu0 0.0
  %197 = vmatprep.subr.mxu0 0.0
  %198 = vmatpush1.msra.mxu0 0.0
  %199 = vmatprep.subr.mxu0 0.0
  %200 = vmatpush1.msra.mxu0 0.0
  %201 = vmatprep.subr.mxu0 0.0
  %202 = vmatpush1.msra.mxu0 0.0
  %203 = vmatprep.subr.mxu0 0.0
  %204 = vmatpush1.msra.mxu0 0.0
  %205 = vmatprep.subr.mxu0 0.0
  %206 = vmatpush1.msra.mxu0 0.0
  %207 = vmatprep.subr.mxu0 0.0
  %208 = vmatpush1.msra.mxu0 0.0
  %209 = vmatprep.subr.mxu0 0.0
  %210 = vmatpush1.msra.mxu0 0.0
  %211 = vmatprep.subr.mxu0 0.0
  %212 = vmatpush1.msra.mxu0 0.0
  %213 = vmatprep.subr.mxu0 0.0
  %214 = vmatpush1.msra.mxu0 0.0
  %215 = vmatprep.subr.mxu0 0.0
  %216 = vmatpush1.msra.mxu0 0.0
  %217 = vmatprep.subr.mxu0 0.0
  %218 = vmatpush1.msra.mxu0 0.0
  %219 = vmatprep.subr.mxu0 0.0
  %220 = vmatpush1.msra.mxu0 0.0
  %221 = vmatprep.subr.mxu0 0.0
  %222 = vmatpush1.msra.mxu0 0.0
  %223 = vmatprep.subr.mxu0 0.0
  %224 = vmatpush1.msra.mxu0 0.0
  %225 = vmatprep.subr.mxu0 0.0
  %226 = vmatpush1.msra.mxu0 0.0
  %227 = vmatprep.subr.mxu0 0.0
  %228 = vmatpush1.msra.mxu0 0.0
  %229 = vmatprep.subr.mxu0 0.0
  %230 = vmatpush1.msra.mxu0 0.0
  %231 = vmatprep.subr.mxu0 0.0
  %232 = vmatpush1.msra.mxu0 0.0
  %233 = vmatprep.subr.mxu0 0.0
  %234 = vmatpush1.msra.mxu0 0.0
  %235 = vmatprep.mubr.f32.mxu0 0.0
  %236 = vmatmul.mubr.f32.gmra.mrb[0].mxu0 %v169
  %v237 = vpop.f32.mrb[0].mxu0
  %v238 = vadd.f32 0.0, %v237
  %v239 = vpop.f32.mrb[0].mxu0
  %240 = vdwg.mxu0
  %v241 = vadd.f32 %v125, %v238
  %v242 = vxor.u32 %v241, 2147483648
  %v243 = vmul.f32 %v242, 1.442695
  %v244 = vpow.pop %v243
  %v245 = vadd.f32 %v244, 1.0
  %v246 = vrcp.pop %v245
  %v247 = vmul.f32 1.0, %v246
  %v248 = vtanh.pop %v241
  %v249 = vmul.f32 %v247, 0.0
  %251 = vrot.lane.b32.xlu0 %v248, 64
  %v252 = vpop.permute.xlu0 %251
  %v254 = vmul.f32 %v247, %v252
  %256 = vrot.lane.b32.xlu0 %v254, 32
  %v257 = vpop.permute.xlu0 %256
  %v259 = vadd.f32 %v249, %v257
  %v260 = vtanh.pop %v259
  %262 = vrot.lane.b32.xlu0 %v260, 64
  %v263 = vpop.permute.xlu0 %262
  %v265 = vmul.f32 %v247, %v263
  %267 = vrot.lane.b32.xlu0 %v265, 32
  %v268 = vpop.permute.xlu0 %267
  %v269 = vsel %vm167, %v268, 0
  %271 = vmatprep.subr.mxu0 0.0
  %272 = vmatpush1.msra.mxu0 %v163
  %273 = vmatprep.subr.mxu0 0.0
  %274 = vmatpush1.msra.mxu0 %v164
  %275 = vmatprep.subr.mxu0 0.0
  %276 = vmatpush1.msra.mxu0 %v165
  %277 = vmatprep.subr.mxu0 0.0
  %278 = vmatpush1.msra.mxu0 %v166
  %279 = vmatprep.subr.mxu0 0.0
  %280 = vmatpush1.msra.mxu0 0.0
  %281 = vmatprep.subr.mxu0 0.0
  %282 = vmatpush1.msra.mxu0 0.0
  %283 = vmatprep.subr.mxu0 0.0
  %284 = vmatpush1.msra.mxu0 0.0
  %285 = vmatprep.subr.mxu0 0.0
  %286 = vmatpush1.msra.mxu0 0.0
  %287 = vmatprep.subr.mxu0 0.0
  %288 = vmatpush1.msra.mxu0 0.0
  %289 = vmatprep.subr.mxu0 0.0
  %290 = vmatpush1.msra.mxu0 0.0
  %291 = vmatprep.subr.mxu0 0.0
  %292 = vmatpush1.msra.mxu0 0.0
  %293 = vmatprep.subr.mxu0 0.0
  %294 = vmatpush1.msra.mxu0 0.0
  %295 = vmatprep.subr.mxu0 0.0
  %296 = vmatpush1.msra.mxu0 0.0
  %297 = vmatprep.subr.mxu0 0.0
  %298 = vmatpush1.msra.mxu0 0.0
  %299 = vmatprep.subr.mxu0 0.0
  %300 = vmatpush1.msra.mxu0 0.0
  %301 = vmatprep.subr.mxu0 0.0
  %302 = vmatpush1.msra.mxu0 0.0
  %303 = vmatprep.subr.mxu0 0.0
  %304 = vmatpush1.msra.mxu0 0.0
  %305 = vmatprep.subr.mxu0 0.0
  %306 = vmatpush1.msra.mxu0 0.0
  %307 = vmatprep.subr.mxu0 0.0
  %308 = vmatpush1.msra.mxu0 0.0
  %309 = vmatprep.subr.mxu0 0.0
  %310 = vmatpush1.msra.mxu0 0.0
  %311 = vmatprep.subr.mxu0 0.0
  %312 = vmatpush1.msra.mxu0 0.0
  %313 = vmatprep.subr.mxu0 0.0
  %314 = vmatpush1.msra.mxu0 0.0
  %315 = vmatprep.subr.mxu0 0.0
  %316 = vmatpush1.msra.mxu0 0.0
  %317 = vmatprep.subr.mxu0 0.0
  %318 = vmatpush1.msra.mxu0 0.0
  %319 = vmatprep.subr.mxu0 0.0
  %320 = vmatpush1.msra.mxu0 0.0
  %321 = vmatprep.subr.mxu0 0.0
  %322 = vmatpush1.msra.mxu0 0.0
  %323 = vmatprep.subr.mxu0 0.0
  %324 = vmatpush1.msra.mxu0 0.0
  %325 = vmatprep.subr.mxu0 0.0
  %326 = vmatpush1.msra.mxu0 0.0
  %327 = vmatprep.subr.mxu0 0.0
  %328 = vmatpush1.msra.mxu0 0.0
  %329 = vmatprep.subr.mxu0 0.0
  %330 = vmatpush1.msra.mxu0 0.0
  %331 = vmatprep.subr.mxu0 0.0
  %332 = vmatpush1.msra.mxu0 0.0
  %333 = vmatprep.subr.mxu0 0.0
  %334 = vmatpush1.msra.mxu0 0.0
  %335 = vmatprep.mubr.f32.mxu0 0.0
  %336 = vmatmul.mubr.f32.gmra.mrb[0].mxu0 %v269
  %v337 = vpop.f32.mrb[0].mxu0
  %v338 = vadd.f32 0.0, %v337
  %v339 = vpop.f32.mrb[0].mxu0
  %340 = vdwg.mxu0
  %v341 = vadd.f32 %v130, %v338
  %v342 = vxor.u32 %v341, 2147483648
  %v343 = vmul.f32 %v342, 1.442695
  %v344 = vpow.pop %v343
  %v345 = vadd.f32 %v344, 1.0
  %v346 = vrcp.pop %v345
  %v347 = vmul.f32 1.0, %v346
  %v348 = vtanh.pop %v341
  %v349 = vmul.f32 %v347, %v259
  %351 = vrot.lane.b32.xlu0 %v348, 64
  %v352 = vpop.permute.xlu0 %351
  %v354 = vmul.f32 %v347, %v352
  %356 = vrot.lane.b32.xlu0 %v354, 32
  %v357 = vpop.permute.xlu0 %356
  %v359 = vadd.f32 %v349, %v357
  %v360 = vtanh.pop %v359
  %362 = vrot.lane.b32.xlu0 %v360, 64
  %v363 = vpop.permute.xlu0 %362
  %v365 = vmul.f32 %v347, %v363
  %367 = vrot.lane.b32.xlu0 %v365, 32
  %v368 = vpop.permute.xlu0 %367
  %v369 = vsel %vm167, %v368, 0
  %371 = vmatprep.subr.mxu0 0.0
  %372 = vmatpush1.msra.mxu0 %v163
  %373 = vmatprep.subr.mxu0 0.0
  %374 = vmatpush1.msra.mxu0 %v164
  %375 = vmatprep.subr.mxu0 0.0
  %376 = vmatpush1.msra.mxu0 %v165
  %377 = vmatprep.subr.mxu0 0.0
  %378 = vmatpush1.msra.mxu0 %v166
  %379 = vmatprep.subr.mxu0 0.0
  %380 = vmatpush1.msra.mxu0 0.0
  %381 = vmatprep.subr.mxu0 0.0
  %382 = vmatpush1.msra.mxu0 0.0
  %383 = vmatprep.subr.mxu0 0.0
  %384 = vmatpush1.msra.mxu0 0.0
  %385 = vmatprep.subr.mxu0 0.0
  %386 = vmatpush1.msra.mxu0 0.0
  %387 = vmatprep.subr.mxu0 0.0
  %388 = vmatpush1.msra.mxu0 0.0
  %389 = vmatprep.subr.mxu0 0.0
  %390 = vmatpush1.msra.mxu0 0.0
  %391 = vmatprep.subr.mxu0 0.0
  %392 = vmatpush1.msra.mxu0 0.0
  %393 = vmatprep.subr.mxu0 0.0
  %394 = vmatpush1.msra.mxu0 0.0
  %395 = vmatprep.subr.mxu0 0.0
  %396 = vmatpush1.msra.mxu0 0.0
  %397 = vmatprep.subr.mxu0 0.0
  %398 = vmatpush1.msra.mxu0 0.0
  %399 = vmatprep.subr.mxu0 0.0
  %400 = vmatpush1.msra.mxu0 0.0
  %401 = vmatprep.subr.mxu0 0.0
  %402 = vmatpush1.msra.mxu0 0.0
  %403 = vmatprep.subr.mxu0 0.0
  %404 = vmatpush1.msra.mxu0 0.0
  %405 = vmatprep.subr.mxu0 0.0
  %406 = vmatpush1.msra.mxu0 0.0
  %407 = vmatprep.subr.mxu0 0.0
  %408 = vmatpush1.msra.mxu0 0.0
  %409 = vmatprep.subr.mxu0 0.0
  %410 = vmatpush1.msra.mxu0 0.0
  %411 = vmatprep.subr.mxu0 0.0
  %412 = vmatpush1.msra.mxu0 0.0
  %413 = vmatprep.subr.mxu0 0.0
  %414 = vmatpush1.msra.mxu0 0.0
  %415 = vmatprep.subr.mxu0 0.0
  %416 = vmatpush1.msra.mxu0 0.0
  %417 = vmatprep.subr.mxu0 0.0
  %418 = vmatpush1.msra.mxu0 0.0
  %419 = vmatprep.subr.mxu0 0.0
  %420 = vmatpush1.msra.mxu0 0.0
  %421 = vmatprep.subr.mxu0 0.0
  %422 = vmatpush1.msra.mxu0 0.0
  %423 = vmatprep.subr.mxu0 0.0
  %424 = vmatpush1.msra.mxu0 0.0
  %425 = vmatprep.subr.mxu0 0.0
  %426 = vmatpush1.msra.mxu0 0.0
  %427 = vmatprep.subr.mxu0 0.0
  %428 = vmatpush1.msra.mxu0 0.0
  %429 = vmatprep.subr.mxu0 0.0
  %430 = vmatpush1.msra.mxu0 0.0
  %431 = vmatprep.subr.mxu0 0.0
  %432 = vmatpush1.msra.mxu0 0.0
  %433 = vmatprep.subr.mxu0 0.0
  %434 = vmatpush1.msra.mxu0 0.0
  %435 = vmatprep.mubr.f32.mxu0 0.0
  %436 = vmatmul.mubr.f32.gmra.mrb[0].mxu0 %v369
  %v437 = vpop.f32.mrb[0].mxu0
  %v438 = vadd.f32 0.0, %v437
  %v439 = vpop.f32.mrb[0].mxu0
  %440 = vdwg.mxu0
  %v441 = vadd.f32 %v135, %v438
  %v442 = vxor.u32 %v441, 2147483648
  %v443 = vmul.f32 %v442, 1.442695
  %v444 = vpow.pop %v443
  %v445 = vadd.f32 %v444, 1.0
  %v446 = vrcp.pop %v445
  %v447 = vmul.f32 1.0, %v446
  %v448 = vtanh.pop %v441
  %v449 = vmul.f32 %v447, %v359
  %451 = vrot.lane.b32.xlu0 %v448, 64
  %v452 = vpop.permute.xlu0 %451
  %v454 = vmul.f32 %v447, %v452
  %456 = vrot.lane.b32.xlu0 %v454, 32
  %v457 = vpop.permute.xlu0 %456
  %v459 = vadd.f32 %v449, %v457
  %v460 = vtanh.pop %v459
  %462 = vrot.lane.b32.xlu0 %v460, 64
  %v463 = vpop.permute.xlu0 %462
  %v465 = vmul.f32 %v447, %v463
  %467 = vrot.lane.b32.xlu0 %v465, 32
  %v468 = vpop.permute.xlu0 %467
  %v469 = vsel %vm167, %v468, 0
  %471 = vmatprep.subr.mxu0 0.0
  %472 = vmatpush1.msra.mxu0 %v163
  %473 = vmatprep.subr.mxu0 0.0
  %474 = vmatpush1.msra.mxu0 %v164
  %475 = vmatprep.subr.mxu0 0.0
  %476 = vmatpush1.msra.mxu0 %v165
  %477 = vmatprep.subr.mxu0 0.0
  %478 = vmatpush1.msra.mxu0 %v166
  %479 = vmatprep.subr.mxu0 0.0
  %480 = vmatpush1.msra.mxu0 0.0
  %481 = vmatprep.subr.mxu0 0.0
  %482 = vmatpush1.msra.mxu0 0.0
  %483 = vmatprep.subr.mxu0 0.0
  %484 = vmatpush1.msra.mxu0 0.0
  %485 = vmatprep.subr.mxu0 0.0
  %486 = vmatpush1.msra.mxu0 0.0
  %487 = vmatprep.subr.mxu0 0.0
  %488 = vmatpush1.msra.mxu0 0.0
  %489 = vmatprep.subr.mxu0 0.0
  %490 = vmatpush1.msra.mxu0 0.0
  %491 = vmatprep.subr.mxu0 0.0
  %492 = vmatpush1.msra.mxu0 0.0
  %493 = vmatprep.subr.mxu0 0.0
  %494 = vmatpush1.msra.mxu0 0.0
  %495 = vmatprep.subr.mxu0 0.0
  %496 = vmatpush1.msra.mxu0 0.0
  %497 = vmatprep.subr.mxu0 0.0
  %498 = vmatpush1.msra.mxu0 0.0
  %499 = vmatprep.subr.mxu0 0.0
  %500 = vmatpush1.msra.mxu0 0.0
  %501 = vmatprep.subr.mxu0 0.0
  %502 = vmatpush1.msra.mxu0 0.0
  %503 = vmatprep.subr.mxu0 0.0
  %504 = vmatpush1.msra.mxu0 0.0
  %505 = vmatprep.subr.mxu0 0.0
  %506 = vmatpush1.msra.mxu0 0.0
  %507 = vmatprep.subr.mxu0 0.0
  %508 = vmatpush1.msra.mxu0 0.0
  %509 = vmatprep.subr.mxu0 0.0
  %510 = vmatpush1.msra.mxu0 0.0
  %511 = vmatprep.subr.mxu0 0.0
  %512 = vmatpush1.msra.mxu0 0.0
  %513 = vmatprep.subr.mxu0 0.0
  %514 = vmatpush1.msra.mxu0 0.0
  %515 = vmatprep.subr.mxu0 0.0
  %516 = vmatpush1.msra.mxu0 0.0
  %517 = vmatprep.subr.mxu0 0.0
  %518 = vmatpush1.msra.mxu0 0.0
  %519 = vmatprep.subr.mxu0 0.0
  %520 = vmatpush1.msra.mxu0 0.0
  %521 = vmatprep.subr.mxu0 0.0
  %522 = vmatpush1.msra.mxu0 0.0
  %523 = vmatprep.subr.mxu0 0.0
  %524 = vmatpush1.msra.mxu0 0.0
  %525 = vmatprep.subr.mxu0 0.0
  %526 = vmatpush1.msra.mxu0 0.0
  %527 = vmatprep.subr.mxu0 0.0
  %528 = vmatpush1.msra.mxu0 0.0
  %529 = vmatprep.subr.mxu0 0.0
  %530 = vmatpush1.msra.mxu0 0.0
  %531 = vmatprep.subr.mxu0 0.0
  %532 = vmatpush1.msra.mxu0 0.0
  %533 = vmatprep.subr.mxu0 0.0
  %534 = vmatpush1.msra.mxu0 0.0
  %535 = vmatprep.mubr.f32.mxu0 0.0
  %536 = vmatmul.mubr.f32.gmra.mrb[0].mxu0 %v469
  %v537 = vpop.f32.mrb[0].mxu0
  %v538 = vadd.f32 0.0, %v537
  %v539 = vpop.f32.mrb[0].mxu0
  %540 = vdwg.mxu0
  %v541 = vadd.f32 %v140, %v538
  %v542 = vxor.u32 %v541, 2147483648
  %v543 = vmul.f32 %v542, 1.442695
  %v544 = vpow.pop %v543
  %v545 = vadd.f32 %v544, 1.0
  %v546 = vrcp.pop %v545
  %v547 = vmul.f32 1.0, %v546
  %v548 = vtanh.pop %v541
  %v549 = vmul.f32 %v547, %v459
  %551 = vrot.lane.b32.xlu0 %v548, 64
  %v552 = vpop.permute.xlu0 %551
  %v554 = vmul.f32 %v547, %v552
  %556 = vrot.lane.b32.xlu0 %v554, 32
  %v557 = vpop.permute.xlu0 %556
  %v559 = vadd.f32 %v549, %v557
  %v560 = vtanh.pop %v559
  %562 = vrot.lane.b32.xlu0 %v560, 64
  %v563 = vpop.permute.xlu0 %562
  %v565 = vmul.f32 %v547, %v563
  %567 = vrot.lane.b32.xlu0 %v565, 32
  %v568 = vpop.permute.xlu0 %567
  %v569 = vsel %vm167, %v568, 0
  %571 = vmatprep.subr.mxu0 0.0
  %572 = vmatpush1.msra.mxu0 %v163
  %573 = vmatprep.subr.mxu0 0.0
  %574 = vmatpush1.msra.mxu0 %v164
  %575 = vmatprep.subr.mxu0 0.0
  %576 = vmatpush1.msra.mxu0 %v165
  %577 = vmatprep.subr.mxu0 0.0
  %578 = vmatpush1.msra.mxu0 %v166
  %579 = vmatprep.subr.mxu0 0.0
  %580 = vmatpush1.msra.mxu0 0.0
  %581 = vmatprep.subr.mxu0 0.0
  %582 = vmatpush1.msra.mxu0 0.0
  %583 = vmatprep.subr.mxu0 0.0
  %584 = vmatpush1.msra.mxu0 0.0
  %585 = vmatprep.subr.mxu0 0.0
  %586 = vmatpush1.msra.mxu0 0.0
  %587 = vmatprep.subr.mxu0 0.0
  %588 = vmatpush1.msra.mxu0 0.0
  %589 = vmatprep.subr.mxu0 0.0
  %590 = vmatpush1.msra.mxu0 0.0
  %591 = vmatprep.subr.mxu0 0.0
  %592 = vmatpush1.msra.mxu0 0.0
  %593 = vmatprep.subr.mxu0 0.0
  %594 = vmatpush1.msra.mxu0 0.0
  %595 = vmatprep.subr.mxu0 0.0
  %596 = vmatpush1.msra.mxu0 0.0
  %597 = vmatprep.subr.mxu0 0.0
  %598 = vmatpush1.msra.mxu0 0.0
  %599 = vmatprep.subr.mxu0 0.0
  %600 = vmatpush1.msra.mxu0 0.0
  %601 = vmatprep.subr.mxu0 0.0
  %602 = vmatpush1.msra.mxu0 0.0
  %603 = vmatprep.subr.mxu0 0.0
  %604 = vmatpush1.msra.mxu0 0.0
  %605 = vmatprep.subr.mxu0 0.0
  %606 = vmatpush1.msra.mxu0 0.0
  %607 = vmatprep.subr.mxu0 0.0
  %608 = vmatpush1.msra.mxu0 0.0
  %609 = vmatprep.subr.mxu0 0.0
  %610 = vmatpush1.msra.mxu0 0.0
  %611 = vmatprep.subr.mxu0 0.0
  %612 = vmatpush1.msra.mxu0 0.0
  %613 = vmatprep.subr.mxu0 0.0
  %614 = vmatpush1.msra.mxu0 0.0
  %615 = vmatprep.subr.mxu0 0.0
  %616 = vmatpush1.msra.mxu0 0.0
  %617 = vmatprep.subr.mxu0 0.0
  %618 = vmatpush1.msra.mxu0 0.0
  %619 = vmatprep.subr.mxu0 0.0
  %620 = vmatpush1.msra.mxu0 0.0
  %621 = vmatprep.subr.mxu0 0.0
  %622 = vmatpush1.msra.mxu0 0.0
  %623 = vmatprep.subr.mxu0 0.0
  %624 = vmatpush1.msra.mxu0 0.0
  %625 = vmatprep.subr.mxu0 0.0
  %626 = vmatpush1.msra.mxu0 0.0
  %627 = vmatprep.subr.mxu0 0.0
  %628 = vmatpush1.msra.mxu0 0.0
  %629 = vmatprep.subr.mxu0 0.0
  %630 = vmatpush1.msra.mxu0 0.0
  %631 = vmatprep.subr.mxu0 0.0
  %632 = vmatpush1.msra.mxu0 0.0
  %633 = vmatprep.subr.mxu0 0.0
  %634 = vmatpush1.msra.mxu0 0.0
  %635 = vmatprep.mubr.f32.mxu0 0.0
  %636 = vmatmul.mubr.f32.gmra.mrb[0].mxu0 %v569
  %v637 = vpop.f32.mrb[0].mxu0
  %v638 = vadd.f32 0.0, %v637
  %v639 = vpop.f32.mrb[0].mxu0
  %640 = vdwg.mxu0
  %v641 = vadd.f32 %v145, %v638
  %v642 = vxor.u32 %v641, 2147483648
  %v643 = vmul.f32 %v642, 1.442695
  %v644 = vpow.pop %v643
  %v645 = vadd.f32 %v644, 1.0
  %v646 = vrcp.pop %v645
  %v647 = vmul.f32 1.0, %v646
  %v648 = vtanh.pop %v641
  %v649 = vmul.f32 %v647, %v559
  %651 = vrot.lane.b32.xlu0 %v648, 64
  %v652 = vpop.permute.xlu0 %651
  %v654 = vmul.f32 %v647, %v652
  %656 = vrot.lane.b32.xlu0 %v654, 32
  %v657 = vpop.permute.xlu0 %656
  %v659 = vadd.f32 %v649, %v657
  %v660 = vtanh.pop %v659
  %662 = vrot.lane.b32.xlu0 %v660, 64
  %v663 = vpop.permute.xlu0 %662
  %v665 = vmul.f32 %v647, %v663
  %667 = vrot.lane.b32.xlu0 %v665, 32
  %v668 = vpop.permute.xlu0 %667
  %v669 = vsel %vm167, %v668, 0
  %671 = vmatprep.subr.mxu0 0.0
  %672 = vmatpush1.msra.mxu0 %v163
  %673 = vmatprep.subr.mxu0 0.0
  %674 = vmatpush1.msra.mxu0 %v164
  %675 = vmatprep.subr.mxu0 0.0
  %676 = vmatpush1.msra.mxu0 %v165
  %677 = vmatprep.subr.mxu0 0.0
  %678 = vmatpush1.msra.mxu0 %v166
  %679 = vmatprep.subr.mxu0 0.0
  %680 = vmatpush1.msra.mxu0 0.0
  %681 = vmatprep.subr.mxu0 0.0
  %682 = vmatpush1.msra.mxu0 0.0
  %683 = vmatprep.subr.mxu0 0.0
  %684 = vmatpush1.msra.mxu0 0.0
  %685 = vmatprep.subr.mxu0 0.0
  %686 = vmatpush1.msra.mxu0 0.0
  %687 = vmatprep.subr.mxu0 0.0
  %688 = vmatpush1.msra.mxu0 0.0
  %689 = vmatprep.subr.mxu0 0.0
  %690 = vmatpush1.msra.mxu0 0.0
  %691 = vmatprep.subr.mxu0 0.0
  %692 = vmatpush1.msra.mxu0 0.0
  %693 = vmatprep.subr.mxu0 0.0
  %694 = vmatpush1.msra.mxu0 0.0
  %695 = vmatprep.subr.mxu0 0.0
  %696 = vmatpush1.msra.mxu0 0.0
  %697 = vmatprep.subr.mxu0 0.0
  %698 = vmatpush1.msra.mxu0 0.0
  %699 = vmatprep.subr.mxu0 0.0
  %700 = vmatpush1.msra.mxu0 0.0
  %701 = vmatprep.subr.mxu0 0.0
  %702 = vmatpush1.msra.mxu0 0.0
  %703 = vmatprep.subr.mxu0 0.0
  %704 = vmatpush1.msra.mxu0 0.0
  %705 = vmatprep.subr.mxu0 0.0
  %706 = vmatpush1.msra.mxu0 0.0
  %707 = vmatprep.subr.mxu0 0.0
  %708 = vmatpush1.msra.mxu0 0.0
  %709 = vmatprep.subr.mxu0 0.0
  %710 = vmatpush1.msra.mxu0 0.0
  %711 = vmatprep.subr.mxu0 0.0
  %712 = vmatpush1.msra.mxu0 0.0
  %713 = vmatprep.subr.mxu0 0.0
  %714 = vmatpush1.msra.mxu0 0.0
  %715 = vmatprep.subr.mxu0 0.0
  %716 = vmatpush1.msra.mxu0 0.0
  %717 = vmatprep.subr.mxu0 0.0
  %718 = vmatpush1.msra.mxu0 0.0
  %719 = vmatprep.subr.mxu0 0.0
  %720 = vmatpush1.msra.mxu0 0.0
  %721 = vmatprep.subr.mxu0 0.0
  %722 = vmatpush1.msra.mxu0 0.0
  %723 = vmatprep.subr.mxu0 0.0
  %724 = vmatpush1.msra.mxu0 0.0
  %725 = vmatprep.subr.mxu0 0.0
  %726 = vmatpush1.msra.mxu0 0.0
  %727 = vmatprep.subr.mxu0 0.0
  %728 = vmatpush1.msra.mxu0 0.0
  %729 = vmatprep.subr.mxu0 0.0
  %730 = vmatpush1.msra.mxu0 0.0
  %731 = vmatprep.subr.mxu0 0.0
  %732 = vmatpush1.msra.mxu0 0.0
  %733 = vmatprep.subr.mxu0 0.0
  %734 = vmatpush1.msra.mxu0 0.0
  %735 = vmatprep.mubr.f32.mxu0 0.0
  %736 = vmatmul.mubr.f32.gmra.mrb[0].mxu0 %v669
  %v737 = vpop.f32.mrb[0].mxu0
  %v738 = vadd.f32 0.0, %v737
  %v739 = vpop.f32.mrb[0].mxu0
  %740 = vdwg.mxu0
  %v741 = vadd.f32 %v150, %v738
  %v742 = vxor.u32 %v741, 2147483648
  %v743 = vmul.f32 %v742, 1.442695
  %v744 = vpow.pop %v743
  %v745 = vadd.f32 %v744, 1.0
  %v746 = vrcp.pop %v745
  %v747 = vmul.f32 1.0, %v746
  %v748 = vtanh.pop %v741
  %v749 = vmul.f32 %v747, %v659
  %751 = vrot.lane.b32.xlu0 %v748, 64
  %v752 = vpop.permute.xlu0 %751
  %v754 = vmul.f32 %v747, %v752
  %756 = vrot.lane.b32.xlu0 %v754, 32
  %v757 = vpop.permute.xlu0 %756
  %v759 = vadd.f32 %v749, %v757
  %v760 = vtanh.pop %v759
  %762 = vrot.lane.b32.xlu0 %v760, 64
  %v763 = vpop.permute.xlu0 %762
  %v765 = vmul.f32 %v747, %v763
  %767 = vrot.lane.b32.xlu0 %v765, 32
  %v768 = vpop.permute.xlu0 %767
  %v769 = vsel %vm167, %v768, 0
  %771 = vmatprep.subr.mxu0 0.0
  %772 = vmatpush1.msra.mxu0 %v163
  %773 = vmatprep.subr.mxu0 0.0
  %774 = vmatpush1.msra.mxu0 %v164
  %775 = vmatprep.subr.mxu0 0.0
  %776 = vmatpush1.msra.mxu0 %v165
  %777 = vmatprep.subr.mxu0 0.0
  %778 = vmatpush1.msra.mxu0 %v166
  %779 = vmatprep.subr.mxu0 0.0
  %780 = vmatpush1.msra.mxu0 0.0
  %781 = vmatprep.subr.mxu0 0.0
  %782 = vmatpush1.msra.mxu0 0.0
  %783 = vmatprep.subr.mxu0 0.0
  %784 = vmatpush1.msra.mxu0 0.0
  %785 = vmatprep.subr.mxu0 0.0
  %786 = vmatpush1.msra.mxu0 0.0
  %787 = vmatprep.subr.mxu0 0.0
  %788 = vmatpush1.msra.mxu0 0.0
  %789 = vmatprep.subr.mxu0 0.0
  %790 = vmatpush1.msra.mxu0 0.0
  %791 = vmatprep.subr.mxu0 0.0
  %792 = vmatpush1.msra.mxu0 0.0
  %793 = vmatprep.subr.mxu0 0.0
  %794 = vmatpush1.msra.mxu0 0.0
  %795 = vmatprep.subr.mxu0 0.0
  %796 = vmatpush1.msra.mxu0 0.0
  %797 = vmatprep.subr.mxu0 0.0
  %798 = vmatpush1.msra.mxu0 0.0
  %799 = vmatprep.subr.mxu0 0.0
  %800 = vmatpush1.msra.mxu0 0.0
  %801 = vmatprep.subr.mxu0 0.0
  %802 = vmatpush1.msra.mxu0 0.0
  %803 = vmatprep.subr.mxu0 0.0
  %804 = vmatpush1.msra.mxu0 0.0
  %805 = vmatprep.subr.mxu0 0.0
  %806 = vmatpush1.msra.mxu0 0.0
  %807 = vmatprep.subr.mxu0 0.0
  %808 = vmatpush1.msra.mxu0 0.0
  %809 = vmatprep.subr.mxu0 0.0
  %810 = vmatpush1.msra.mxu0 0.0
  %811 = vmatprep.subr.mxu0 0.0
  %812 = vmatpush1.msra.mxu0 0.0
  %813 = vmatprep.subr.mxu0 0.0
  %814 = vmatpush1.msra.mxu0 0.0
  %815 = vmatprep.subr.mxu0 0.0
  %816 = vmatpush1.msra.mxu0 0.0
  %817 = vmatprep.subr.mxu0 0.0
  %818 = vmatpush1.msra.mxu0 0.0
  %819 = vmatprep.subr.mxu0 0.0
  %820 = vmatpush1.msra.mxu0 0.0
  %821 = vmatprep.subr.mxu0 0.0
  %822 = vmatpush1.msra.mxu0 0.0
  %823 = vmatprep.subr.mxu0 0.0
  %824 = vmatpush1.msra.mxu0 0.0
  %825 = vmatprep.subr.mxu0 0.0
  %826 = vmatpush1.msra.mxu0 0.0
  %827 = vmatprep.subr.mxu0 0.0
  %828 = vmatpush1.msra.mxu0 0.0
  %829 = vmatprep.subr.mxu0 0.0
  %830 = vmatpush1.msra.mxu0 0.0
  %831 = vmatprep.subr.mxu0 0.0
  %832 = vmatpush1.msra.mxu0 0.0
  %833 = vmatprep.subr.mxu0 0.0
  %834 = vmatpush1.msra.mxu0 0.0
  %835 = vmatprep.mubr.f32.mxu0 0.0
  %836 = vmatmul.mubr.f32.gmra.mrb[0].mxu0 %v769
  %v837 = vpop.f32.mrb[0].mxu0
  %v838 = vadd.f32 0.0, %v837
  %v839 = vpop.f32.mrb[0].mxu0
  %840 = vdwg.mxu0
  %v841 = vadd.f32 %v155, %v838
  %v842 = vxor.u32 %v841, 2147483648
  %v843 = vmul.f32 %v842, 1.442695
  %v844 = vpow.pop %v843
  %v845 = vadd.f32 %v844, 1.0
  %v846 = vrcp.pop %v845
  %v847 = vmul.f32 1.0, %v846
  %v848 = vtanh.pop %v841
  %v849 = vmul.f32 %v847, %v759
  %851 = vrot.lane.b32.xlu0 %v848, 64
  %v852 = vpop.permute.xlu0 %851
  %v854 = vmul.f32 %v847, %v852
  %856 = vrot.lane.b32.xlu0 %v854, 32
  %v857 = vpop.permute.xlu0 %856
  %v859 = vadd.f32 %v849, %v857
  %v860 = vtanh.pop %v859
  %862 = vrot.lane.b32.xlu0 %v860, 64
  %v863 = vpop.permute.xlu0 %862
  %v865 = vmul.f32 %v847, %v863
  %867 = vrot.lane.b32.xlu0 %v865, 32
  %v868 = vpop.permute.xlu0 %867
  %v869 = vsel %vm167, %v868, 0
  %871 = vmatprep.subr.mxu0 0.0
  %872 = vmatpush1.msra.mxu0 %v163
  %873 = vmatprep.subr.mxu0 0.0
  %874 = vmatpush1.msra.mxu0 %v164
  %875 = vmatprep.subr.mxu0 0.0
  %876 = vmatpush1.msra.mxu0 %v165
  %877 = vmatprep.subr.mxu0 0.0
  %878 = vmatpush1.msra.mxu0 %v166
  %879 = vmatprep.subr.mxu0 0.0
  %880 = vmatpush1.msra.mxu0 0.0
  %881 = vmatprep.subr.mxu0 0.0
  %882 = vmatpush1.msra.mxu0 0.0
  %883 = vmatprep.subr.mxu0 0.0
  %884 = vmatpush1.msra.mxu0 0.0
  %885 = vmatprep.subr.mxu0 0.0
  %886 = vmatpush1.msra.mxu0 0.0
  %887 = vmatprep.subr.mxu0 0.0
  %888 = vmatpush1.msra.mxu0 0.0
  %889 = vmatprep.subr.mxu0 0.0
  %890 = vmatpush1.msra.mxu0 0.0
  %891 = vmatprep.subr.mxu0 0.0
  %892 = vmatpush1.msra.mxu0 0.0
  %893 = vmatprep.subr.mxu0 0.0
  %894 = vmatpush1.msra.mxu0 0.0
  %895 = vmatprep.subr.mxu0 0.0
  %896 = vmatpush1.msra.mxu0 0.0
  %897 = vmatprep.subr.mxu0 0.0
  %898 = vmatpush1.msra.mxu0 0.0
  %899 = vmatprep.subr.mxu0 0.0
  %900 = vmatpush1.msra.mxu0 0.0
  %901 = vmatprep.subr.mxu0 0.0
  %902 = vmatpush1.msra.mxu0 0.0
  %903 = vmatprep.subr.mxu0 0.0
  %904 = vmatpush1.msra.mxu0 0.0
  %905 = vmatprep.subr.mxu0 0.0
  %906 = vmatpush1.msra.mxu0 0.0
  %907 = vmatprep.subr.mxu0 0.0
  %908 = vmatpush1.msra.mxu0 0.0
  %909 = vmatprep.subr.mxu0 0.0
  %910 = vmatpush1.msra.mxu0 0.0
  %911 = vmatprep.subr.mxu0 0.0
  %912 = vmatpush1.msra.mxu0 0.0
  %913 = vmatprep.subr.mxu0 0.0
  %914 = vmatpush1.msra.mxu0 0.0
  %915 = vmatprep.subr.mxu0 0.0
  %916 = vmatpush1.msra.mxu0 0.0
  %917 = vmatprep.subr.mxu0 0.0
  %918 = vmatpush1.msra.mxu0 0.0
  %919 = vmatprep.subr.mxu0 0.0
  %920 = vmatpush1.msra.mxu0 0.0
  %921 = vmatprep.subr.mxu0 0.0
  %922 = vmatpush1.msra.mxu0 0.0
  %923 = vmatprep.subr.mxu0 0.0
  %924 = vmatpush1.msra.mxu0 0.0
  %925 = vmatprep.subr.mxu0 0.0
  %926 = vmatpush1.msra.mxu0 0.0
  %927 = vmatprep.subr.mxu0 0.0
  %928 = vmatpush1.msra.mxu0 0.0
  %929 = vmatprep.subr.mxu0 0.0
  %930 = vmatpush1.msra.mxu0 0.0
  %931 = vmatprep.subr.mxu0 0.0
  %932 = vmatpush1.msra.mxu0 0.0
  %933 = vmatprep.subr.mxu0 0.0
  %934 = vmatpush1.msra.mxu0 0.0
  %935 = vmatprep.mubr.f32.mxu0 0.0
  %936 = vmatmul.mubr.f32.gmra.mrb[0].mxu0 %v869
  %v937 = vpop.f32.mrb[0].mxu0
  %v938 = vadd.f32 0.0, %v937
  %v939 = vpop.f32.mrb[0].mxu0
  %940 = vdwg.mxu0
  %v941 = vadd.f32 %v160, %v938
  %v942 = vxor.u32 %v941, 2147483648
  %v943 = vmul.f32 %v942, 1.442695
  %v944 = vpow.pop %v943
  %v945 = vadd.f32 %v944, 1.0
  %v946 = vrcp.pop %v945
  %v947 = vmul.f32 1.0, %v946
  %v948 = vtanh.pop %v941
  %v949 = vmul.f32 %v947, %v859
  %951 = vrot.lane.b32.xlu0 %v948, 64
  %v952 = vpop.permute.xlu0 %951
  %v954 = vmul.f32 %v947, %v952
  %956 = vrot.lane.b32.xlu0 %v954, 32
  %v957 = vpop.permute.xlu0 %956
  %v959 = vadd.f32 %v949, %v957
  %v960 = vtanh.pop %v959
  %962 = vrot.lane.b32.xlu0 %v960, 64
  %v963 = vpop.permute.xlu0 %962
  %v965 = vmul.f32 %v947, %v963
  %v966 = vld [vmem:[%s3] sm:$0xff]
  %v967 = vld [vmem:[%s3 + $0x8] sm:$0xff]
  %v968 = vld [vmem:[%s3 + $0x10] sm:$0xff]
  %v969 = vld [vmem:[%s3 + $0x18] sm:$0xff]
  %v970 = vld [vmem:[%s4] sm:$0x1]
  %v972 = vlaneseq
  %v973 = vshrl.u32 %v972, 7
  %v974 = vsub.s32 0, %v973
  %v975 = vrot.slane %v970, %v974
  %978 = vrot.lane.b32.xlu0 %v965, 32
  %v979 = vpop.permute.xlu0 %978
  %v980 = vsel %vm167, %v979, 0
  %982 = vmatprep.subr.mxu0 0.0
  %983 = vmatpush1.msra.mxu0 %v966
  %984 = vmatprep.subr.mxu0 0.0
  %985 = vmatpush1.msra.mxu0 %v967
  %986 = vmatprep.subr.mxu0 0.0
  %987 = vmatpush1.msra.mxu0 %v968
  %988 = vmatprep.subr.mxu0 0.0
  %989 = vmatpush1.msra.mxu0 %v969
  %990 = vmatprep.subr.mxu0 0.0
  %991 = vmatpush1.msra.mxu0 0.0
  %992 = vmatprep.subr.mxu0 0.0
  %993 = vmatpush1.msra.mxu0 0.0
  %994 = vmatprep.subr.mxu0 0.0
  %995 = vmatpush1.msra.mxu0 0.0
  %996 = vmatprep.subr.mxu0 0.0
  %997 = vmatpush1.msra.mxu0 0.0
  %998 = vmatprep.subr.mxu0 0.0
  %999 = vmatpush1.msra.mxu0 0.0
  %1000 = vmatprep.subr.mxu0 0.0
  %1001 = vmatpush1.msra.mxu0 0.0
  %1002 = vmatprep.subr.mxu0 0.0
  %1003 = vmatpush1.msra.mxu0 0.0
  %1004 = vmatprep.subr.mxu0 0.0
  %1005 = vmatpush1.msra.mxu0 0.0
  %1006 = vmatprep.subr.mxu0 0.0
  %1007 = vmatpush1.msra.mxu0 0.0
  %1008 = vmatprep.subr.mxu0 0.0
  %1009 = vmatpush1.msra.mxu0 0.0
  %1010 = vmatprep.subr.mxu0 0.0
  %1011 = vmatpush1.msra.mxu0 0.0
  %1012 = vmatprep.subr.mxu0 0.0
  %1013 = vmatpush1.msra.mxu0 0.0
  %1014 = vmatprep.subr.mxu0 0.0
  %1015 = vmatpush1.msra.mxu0 0.0
  %1016 = vmatprep.subr.mxu0 0.0
  %1017 = vmatpush1.msra.mxu0 0.0
  %1018 = vmatprep.subr.mxu0 0.0
  %1019 = vmatpush1.msra.mxu0 0.0
  %1020 = vmatprep.subr.mxu0 0.0
  %1021 = vmatpush1.msra.mxu0 0.0
  %1022 = vmatprep.subr.mxu0 0.0
  %1023 = vmatpush1.msra.mxu0 0.0
  %1024 = vmatprep.subr.mxu0 0.0
  %1025 = vmatpush1.msra.mxu0 0.0
  %1026 = vmatprep.subr.mxu0 0.0
  %1027 = vmatpush1.msra.mxu0 0.0
  %1028 = vmatprep.subr.mxu0 0.0
  %1029 = vmatpush1.msra.mxu0 0.0
  %1030 = vmatprep.subr.mxu0 0.0
  %1031 = vmatpush1.msra.mxu0 0.0
  %1032 = vmatprep.subr.mxu0 0.0
  %1033 = vmatpush1.msra.mxu0 0.0
  %1034 = vmatprep.subr.mxu0 0.0
  %1035 = vmatpush1.msra.mxu0 0.0
  %1036 = vmatprep.subr.mxu0 0.0
  %1037 = vmatpush1.msra.mxu0 0.0
  %1038 = vmatprep.subr.mxu0 0.0
  %1039 = vmatpush1.msra.mxu0 0.0
  %1040 = vmatprep.subr.mxu0 0.0
  %1041 = vmatpush1.msra.mxu0 0.0
  %1042 = vmatprep.subr.mxu0 0.0
  %1043 = vmatpush1.msra.mxu0 0.0
  %1044 = vmatprep.subr.mxu0 0.0
  %1045 = vmatpush1.msra.mxu0 0.0
  %1046 = vmatprep.mubr.f32.mxu0 0.0
  %1047 = vmatmul.mubr.f32.gmra.mrb[0].mxu0 %v980
  %v1048 = vpop.f32.mrb[0].mxu0
  %v1049 = vadd.f32 %v975, %v1048
  %v1050 = vpop.f32.mrb[0].mxu0
  %1051 = vdwg.mxu0
  %vm1052 = vcmask 64512
  %1053 = vst.msk [vmem:[%s5] sm:$0xff] %vm1052, %v1049
  // Predicated region
  $region22: #{lstm_forward.1} parent=0 // pred_check
    _
  $region23: #{lstm_forward.1} parent=0 // pred_check_branch
    %1055 = sbr.rel (0) target = $region25
  $region24: #{lstm_forward.1} parent=0 // pred_region
    _
  $region25: #{lstm_forward.1} parent=0 // pred_fallthru
    _
  // Predicated region
  $region26: #{lstm_forward.1} parent=0 // pred_check
    _
  $region27: #{lstm_forward.1} parent=0 // pred_check_branch
    %1057 = sbr.rel (0) target = $region29
  $region28: #{lstm_forward.1} parent=0 // pred_region
    _
  $region29: #{lstm_forward.1} parent=0 // pred_fallthru
    _

</llo_original>
